<compile_context>
chip_gen: v7x
topology: tpu7x:2x2x1
jax: 0.10.0
libtpu: 0.0.40
codegen_flags: <defaults>
</compile_context>

<pallas_src>
import functools

import jax
import jax.numpy as jnp
from jax.experimental import pallas as pl
from jax.experimental.pallas import tpu as pltpu


# ---------------------------------------------------------------------------
# Kernels
# ---------------------------------------------------------------------------

def _encoder_kernel(patches_ref, wpe_t_ref, bpe_t_ref, tok_ref):
    """Patch-embed + GELU for one (batch, N-tile) block, written pre-transposed (D, tn)."""
    p = patches_ref[0]                                                    # (tn, P) bf16
    t = jax.lax.dot_general(
        wpe_t_ref[...], p, (((1,), (1,)), ((), ())),
        preferred_element_type=jnp.float32)                               # (D, tn) f32
    tok_ref[0] = jax.nn.gelu(t + bpe_t_ref[...])


def _attn_kernel(scale,
                 patches_ref, prompt_ref,
                 wpe_ref, bpe_ref, wq_ref, wk_ref, wv_ref,
                 inc_ref, tok_ref,
                 q_sc, m_sc, l_sc, acc_sc):
    """Encoder tokens + prompt cross-attention with online softmax over N tiles.

    grid = (B, N_tiles); N_tiles is the (serial) reduction axis for inc.
    Also writes the bf16 encoder tokens so the decoder pass can skip the patch-embed.
    """
    nt = pl.program_id(1)

    @pl.when(nt == 0)
    def _():
        m_sc[...] = jnp.full_like(m_sc, -jnp.inf)
        l_sc[...] = jnp.zeros_like(l_sc)
        acc_sc[...] = jnp.zeros_like(acc_sc)
        # Query projection does not depend on the N tile: compute once per batch element,
        # softmax scale folded in so the score matmul output needs no extra VALU pass.
        pr = prompt_ref[0]                                                # (K, D) bf16
        q_sc[...] = (jnp.dot(pr, wq_ref[...], preferred_element_type=jnp.float32)
                     * scale).astype(jnp.bfloat16)

    # ---- encoder: patch embedding for this N tile ---------------------------
    p = patches_ref[0]                                                    # (tn, P) bf16
    tok = jax.nn.gelu(
        jnp.dot(p, wpe_ref[...], preferred_element_type=jnp.float32)
        + bpe_ref[...])                                                   # (tn, D) f32
    tok_bf = tok.astype(jnp.bfloat16)
    tok_ref[0] = tok_bf                                                   # reused by decoder pass

    # ---- cross-attention: prompts attend to this tile's image tokens -------
    k = jnp.dot(tok_bf, wk_ref[...],
                preferred_element_type=jnp.float32).astype(jnp.bfloat16)  # (tn, D)
    v = jnp.dot(tok_bf, wv_ref[...],
                preferred_element_type=jnp.float32).astype(jnp.bfloat16)  # (tn, D)

    s = jax.lax.dot_general(q_sc[...], k, (((1,), (1,)), ((), ())),
                            preferred_element_type=jnp.float32)           # (K, tn)

    m_prev = m_sc[...]
    m_new = jnp.maximum(m_prev, jnp.max(s, axis=-1, keepdims=True))       # (K, 1)
    alpha = jnp.exp(m_prev - m_new)
    e = jnp.exp(s - m_new)                                                # (K, tn)
    l_sc[...] = alpha * l_sc[...] + jnp.sum(e, axis=-1, keepdims=True)
    acc_sc[...] = alpha * acc_sc[...] + jnp.dot(
        e.astype(jnp.bfloat16), v, preferred_element_type=jnp.float32)    # (K, D)
    m_sc[...] = m_new

    @pl.when(nt == pl.num_programs(1) - 1)
    def _():
        inv_l = pl.reciprocal(l_sc[...], approx=True)
        inc_ref[0] = prompt_ref[0].astype(jnp.float32) + acc_sc[...] * inv_l


def _decoder_kernel(tok_ref, inc_ref, wup_t_ref, bup_t_ref, xup_ref, hm_ref):
    """Decoder: feature projection (pre-transposed x_up) + prototype-matching heatmaps."""
    tok = tok_ref[0]                                                      # (tn, D) bf16

    # x_up^T = gelu(w_up^T @ tok^T + b_up^T), computed as an rhs-transposed matmul so the
    # output is (D, tn): lane-dense in N, no post-hoc transpose needed.
    xup_t = jax.nn.gelu(
        jax.lax.dot_general(wup_t_ref[...], tok, (((1,), (1,)), ((), ())),
                            preferred_element_type=jnp.float32)
        + bup_t_ref[...])                                                 # (D, tn) f32
    xup_ref[0] = xup_t

    hm_ref[0] = jnp.dot(inc_ref[0].astype(jnp.bfloat16),
                        xup_t.astype(jnp.bfloat16),
                        preferred_element_type=jnp.float32)               # (K, tn)


# ---------------------------------------------------------------------------
# Wrapper / glue
# ---------------------------------------------------------------------------

def _im2col(image, patch):
    """NCHW image -> (B, N, C*p*p) flattened non-overlapping patches."""
    # TODO(synk): im2col uses an XLA 6-D transpose; an NHWC-native input layout (or in-kernel
    # row gather) would avoid this extra HBM pass for large images.
    B, C, H, W = image.shape
    hp, wp = H // patch, W // patch
    x = image.reshape(B, C, hp, patch, wp, patch)
    x = jnp.transpose(x, (0, 2, 4, 1, 3, 5))          # (B, hp, wp, C, p, p)
    return x.reshape(B, hp * wp, C * patch * patch)


def _choose_tile(n, max_tile=512):
    """Largest N-tile <= max_tile that is a multiple of 128 and divides n (or n itself)."""
    if n <= max_tile:
        return n
    t = max_tile - (max_tile % 128)
    while t >= 128:
        if n % t == 0:
            return t
        t -= 128
    return n


def _vmem_limit(block_bytes, scratch_bytes=0):
    """Explicit scoped-VMEM budget: 2x (double-buffer) blocks + scratch + headroom."""
    est = 2 * int(block_bytes) + int(scratch_bytes) + (4 << 20)
    return int(min(max(est, 16 << 20), 100 << 20))


def init_params(key, in_ch, patch, embed_dim):
    P = in_ch * patch * patch
    ks = jax.random.split(key, 6)
    s_pe = 1.0 / jnp.sqrt(P)
    s_d = 1.0 / jnp.sqrt(embed_dim)
    return {
        "w_pe": jax.random.normal(ks[0], (P, embed_dim), jnp.float32) * s_pe,
        "b_pe": jnp.zeros((1, embed_dim), jnp.float32),
        "w_q": jax.random.normal(ks[1], (embed_dim, embed_dim), jnp.float32) * s_d,
        "w_k": jax.random.normal(ks[2], (embed_dim, embed_dim), jnp.float32) * s_d,
        "w_v": jax.random.normal(ks[3], (embed_dim, embed_dim), jnp.float32) * s_d,
        "w_up": jax.random.normal(ks[4], (embed_dim, embed_dim), jnp.float32) * s_d,
        "b_up": jnp.zeros((1, embed_dim), jnp.float32),
    }


def proto_pose_forward(params, image, prompt_embeds=None, *, patch=4, max_tile=512):
    """Mirrors ProtoPose.forward."""
    B, C, H, W = image.shape
    hp, wp = H // patch, W // patch
    N = hp * wp
    P = C * patch * patch
    D = params["w_pe"].shape[1]

    patches = _im2col(image.astype(jnp.float32), patch).astype(jnp.bfloat16)  # (B, N, P)
    tn = _choose_tile(N, max_tile)
    num_tiles = N // tn

    # bf16 matmul operands (f32 master params kept in `params`); biases stay f32.
    w_pe = params["w_pe"].astype(jnp.bfloat16)                            # (P, D)
    b_pe = params["b_pe"].astype(jnp.float32)                             # (1, D)

    if prompt_embeds is None:
        # Encoder-only branch: tokens written pre-transposed as (B, D, N).
        w_pe_t = params["w_pe"].T.astype(jnp.bfloat16)                    # (D, P)
        b_pe_t = params["b_pe"].reshape(D, 1).astype(jnp.float32)         # (D, 1)
        blk = tn * P * 2 + D * P * 2 + D * 4 + D * tn * 4
        tok_t = pl.pallas_call(
            _encoder_kernel,
            out_shape=jax.ShapeDtypeStruct((B, D, N), jnp.float32),
            grid=(B, num_tiles),
            in_specs=[
                pl.BlockSpec((1, tn, P), lambda b, t: (b, t, 0)),
                pl.BlockSpec((D, P), lambda b, t: (0, 0)),
                pl.BlockSpec((D, 1), lambda b, t: (0, 0)),
            ],
            out_specs=pl.BlockSpec((1, D, tn), lambda b, t: (b, 0, t)),
            compiler_params=pltpu.CompilerParams(
                dimension_semantics=("parallel", "parallel"),
                vmem_limit_bytes=_vmem_limit(blk)),
            cost_estimate=pl.CostEstimate(
                flops=2 * B * N * P * D,
                transcendentals=B * N * D,
                bytes_accessed=B * N * P * 2 + D * P * 2 + D * 4 + B * N * D * 4),
        )(patches, w_pe_t, b_pe_t)
        return dict(encode_fea=tok_t.reshape(B, D, hp, wp))

    K = prompt_embeds.shape[1]
    scale = 1.0 / float(D) ** 0.5
    prompt_bf = prompt_embeds.astype(jnp.bfloat16)
    w_q = params["w_q"].astype(jnp.bfloat16)
    w_k = params["w_k"].astype(jnp.bfloat16)
    w_v = params["w_v"].astype(jnp.bfloat16)
    w_up_t = params["w_up"].T.astype(jnp.bfloat16)                        # (D, D)
    b_up_t = params["b_up"].reshape(D, 1).astype(jnp.float32)             # (D, 1)

    # ---- pass A: encoder + prompt cross-attention (online softmax over N tiles)
    #      outputs: inc (B,K,D) f32  and the bf16 encoder tokens (B,N,D) reused by pass B.
    blk_a = (tn * P * 2 + K * D * 2 + (P * D + 3 * D * D) * 2 + D * 4
             + K * D * 4 + tn * D * 2)
    scr_a = K * D * 2 + 2 * K * 4 + K * D * 4
    inc, tok = pl.pallas_call(
        functools.partial(_attn_kernel, scale),
        out_shape=(
            jax.ShapeDtypeStruct((B, K, D), jnp.float32),   # inc_embeds
            jax.ShapeDtypeStruct((B, N, D), jnp.bfloat16),  # encoder tokens (shared)
        ),
        grid=(B, num_tiles),
        in_specs=[
            pl.BlockSpec((1, tn, P), lambda b, t: (b, t, 0)),
            pl.BlockSpec((1, K, D), lambda b, t: (b, 0, 0)),
            pl.BlockSpec((P, D), lambda b, t: (0, 0)),
            pl.BlockSpec((1, D), lambda b, t: (0, 0)),
            pl.BlockSpec((D, D), lambda b, t: (0, 0)),
            pl.BlockSpec((D, D), lambda b, t: (0, 0)),
            pl.BlockSpec((D, D), lambda b, t: (0, 0)),
        ],
        out_specs=(
            pl.BlockSpec((1, K, D), lambda b, t: (b, 0, 0)),
            pl.BlockSpec((1, tn, D), lambda b, t: (b, t, 0)),
        ),
        scratch_shapes=[
            pltpu.VMEM((K, D), jnp.bfloat16),   # query projection (scale folded in)
            pltpu.VMEM((K, 1), jnp.float32),    # running max
            pltpu.VMEM((K, 1), jnp.float32),    # running denom
            pltpu.VMEM((K, D), jnp.float32),    # running weighted-V accumulator
        ],
        compiler_params=pltpu.CompilerParams(
            dimension_semantics=("parallel", "arbitrary"),
            vmem_limit_bytes=_vmem_limit(blk_a, scr_a)),
        cost_estimate=pl.CostEstimate(
            flops=B * (2 * N * P * D + 2 * K * D * D + 4 * N * D * D + 4 * K * N * D),
            transcendentals=B * (N * D + 2 * K * N),
            bytes_accessed=(B * N * P * 2 + B * K * D * 2
                            + (P * D + 3 * D * D) * 2 + D * 4
                            + B * K * D * 4 + B * N * D * 2)),
    )(patches, prompt_bf, w_pe, b_pe, w_q, w_k, w_v)

    # ---- pass B: decoder projection (pre-transposed x_up) + prototype heatmaps.
    #      Consumes the tokens from pass A (no patch-embed recompute).
    blk_b = (tn * D * 2 + K * D * 4 + D * D * 2 + D * 4 + D * tn * 4 + K * tn * 4)
    xup_t, hm = pl.pallas_call(
        _decoder_kernel,
        out_shape=(
            jax.ShapeDtypeStruct((B, D, N), jnp.float32),   # x_up, already (D, N) per batch
            jax.ShapeDtypeStruct((B, K, N), jnp.float32),   # heatmaps (flattened spatial)
        ),
        grid=(B, num_tiles),
        in_specs=[
            pl.BlockSpec((1, tn, D), lambda b, t: (b, t, 0)),
            pl.BlockSpec((1, K, D), lambda b, t: (b, 0, 0)),
            pl.BlockSpec((D, D), lambda b, t: (0, 0)),
            pl.BlockSpec((D, 1), lambda b, t: (0, 0)),
        ],
        out_specs=(
            pl.BlockSpec((1, D, tn), lambda b, t: (b, 0, t)),
            pl.BlockSpec((1, K, tn), lambda b, t: (b, 0, t)),
        ),
        compiler_params=pltpu.CompilerParams(
            dimension_semantics=("parallel", "parallel"),
            vmem_limit_bytes=_vmem_limit(blk_b)),
        cost_estimate=pl.CostEstimate(
            flops=B * (2 * N * D * D + 2 * K * N * D),
            transcendentals=B * N * D,
            bytes_accessed=(B * N * D * 2 + B * K * D * 4
                            + D * D * 2 + D * 4
                            + B * N * D * 4 + B * K * N * 4)),
    )(tok, inc, w_up_t, b_up_t)

    x_up = xup_t.reshape(B, D, hp, wp)                                    # (B, D, H/p, W/p)
    heatmaps = hm.reshape(B, K, hp, wp)                                   # (B, K, H/p, W/p)
    # TODO(synk): fast_weights substitution (per-call parameter override) is a training-time
    # mechanism; parameters are passed explicitly instead of swapped by name.
    return dict(encode_fea=x_up, heatmaps=heatmaps)


# ---------------------------------------------------------------------------
# Demo
# ---------------------------------------------------------------------------

if __name__ == "__main__":
    B, C, H, W = 2, 4, 16, 16
    PATCH, D, K = 4, 32, 8

    key = jax.random.PRNGKey(0)
    k_img, k_prompt, k_params = jax.random.split(key, 3)

    image = jax.random.normal(k_img, (B, C, H, W), jnp.float32)
    prompt_embeds = jax.random.normal(k_prompt, (B, K, D), jnp.float32)
    params = init_params(k_params, C, PATCH, D)

    # Branch 1: no prompt -> encoder features only.
    out_enc = proto_pose_forward(params, image, patch=PATCH)
    jax.block_until_ready(out_enc["encode_fea"])
    assert out_enc["encode_fea"].shape == (B, D, H // PATCH, W // PATCH)
    assert bool(jnp.all(jnp.isfinite(out_enc["encode_fea"])))

    # Branch 2: prompt-conditioned -> heatmaps + upsampled features.
    out = proto_pose_forward(params, image, prompt_embeds, patch=PATCH)
    jax.block_until_ready(out["heatmaps"])
    assert out["encode_fea"].shape == (B, D, H // PATCH, W // PATCH)
    assert out["heatmaps"].shape == (B, K, H // PATCH, W // PATCH)
    assert bool(jnp.all(jnp.isfinite(out["encode_fea"])))
    assert bool(jnp.all(jnp.isfinite(out["heatmaps"])))

    print("KERNEL_OK")
</pallas_src>

<mosaic_0001>
module attributes {stable_mosaic.version = 11 : i64} {
  func.func @_encoder_kernel(%arg0: i32, %arg1: i32, %arg2: memref<1x16x64xbf16, #tpu.memory_space<vmem>>, %arg3: memref<32x64xbf16, #tpu.memory_space<vmem>>, %arg4: memref<32x1xf32, #tpu.memory_space<vmem>>, %arg5: memref<1x32x16xf32, #tpu.memory_space<vmem>>) attributes {dimension_semantics = [#tpu.dimension_semantics<parallel>, #tpu.dimension_semantics<parallel>], iteration_bounds = array<i64: 2, 1>, scalar_prefetch = 0 : i64, scratch_operands = 0 : i64, tpu.core_type = #tpu.core_type<tc>, window_params = [{transform_indices = @transform_0, window_bounds = array<i64: 1, 16, 64>}, {pipeline_mode = #tpu.pipeline_mode<synchronous>, transform_indices = @transform_1, window_bounds = array<i64: 32, 64>}, {pipeline_mode = #tpu.pipeline_mode<synchronous>, transform_indices = @transform_2, window_bounds = array<i64: 32, 1>}, {transform_indices = @transform_3, window_bounds = array<i64: 1, 32, 16>}]} {
    %c0 = arith.constant 0 : index
    %c0_0 = arith.constant 0 : index
    %c0_1 = arith.constant 0 : index
    %0 = vector.load %arg2[%c0, %c0_0, %c0_1] : memref<1x16x64xbf16, #tpu.memory_space<vmem>>, vector<1x16x64xbf16>
    %1 = vector.shape_cast %0 : vector<1x16x64xbf16> to vector<16x64xbf16>
    %c0_2 = arith.constant 0 : index
    %c0_3 = arith.constant 0 : index
    %2 = vector.load %arg3[%c0_2, %c0_3] : memref<32x64xbf16, #tpu.memory_space<vmem>>, vector<32x64xbf16>
    %cst = arith.constant dense<0.000000e+00> : vector<32x16xf32>
    %3 = tpu.matmul %2, %1, %cst {dimension_numbers = #tpu.dot_dimension_numbers<[1], [1], [0], [0], [0, 0, 1, 0], [], []>} : vector<32x64xbf16>, vector<16x64xbf16>, vector<32x16xf32> -> vector<32x16xf32>
    %c0_4 = arith.constant 0 : index
    %c0_5 = arith.constant 0 : index
    %4 = vector.load %arg4[%c0_4, %c0_5] : memref<32x1xf32, #tpu.memory_space<vmem>>, vector<32x1xf32>
    %5 = vector.broadcast %4 : vector<32x1xf32> to vector<32x16xf32>
    %6 = arith.addf %3, %5 : vector<32x16xf32>
    %7 = arith.mulf %6, %6 : vector<32x16xf32>
    %8 = arith.mulf %6, %7 : vector<32x16xf32>
    %cst_6 = arith.constant 4.471500e-02 : f32
    %9 = vector.broadcast %cst_6 : f32 to vector<32x16xf32>
    %10 = arith.mulf %9, %8 : vector<32x16xf32>
    %11 = arith.addf %6, %10 : vector<32x16xf32>
    %cst_7 = arith.constant 0.797884583 : f32
    %12 = vector.broadcast %cst_7 : f32 to vector<32x16xf32>
    %13 = arith.mulf %12, %11 : vector<32x16xf32>
    %14 = math.tanh %13 : vector<32x16xf32>
    %cst_8 = arith.constant 1.000000e+00 : f32
    %15 = vector.broadcast %cst_8 : f32 to vector<32x16xf32>
    %16 = arith.addf %15, %14 : vector<32x16xf32>
    %cst_9 = arith.constant 5.000000e-01 : f32
    %17 = vector.broadcast %cst_9 : f32 to vector<32x16xf32>
    %18 = arith.mulf %17, %16 : vector<32x16xf32>
    %19 = arith.mulf %6, %18 : vector<32x16xf32>
    %c0_10 = arith.constant 0 : index
    %c0_11 = arith.constant 0 : index
    %c0_12 = arith.constant 0 : index
    %20 = vector.load %arg5[%c0_10, %c0_11, %c0_12] : memref<1x32x16xf32, #tpu.memory_space<vmem>>, vector<1x32x16xf32>
    %21 = vector.shape_cast %20 : vector<1x32x16xf32> to vector<32x16xf32>
    %22 = vector.shape_cast %19 : vector<32x16xf32> to vector<1x32x16xf32>
    tpu.vector_store %arg5[%c0_10, %c0_11, %c0_12], %22 {strides = array<i32>} : memref<1x32x16xf32, #tpu.memory_space<vmem>>, vector<1x32x16xf32>,
    return
  }
  func.func @transform_0(%arg0: i32, %arg1: i32) -> (i32, i32, i32) {
    %c0_i32 = arith.constant 0 : i32
    %c0_i32_0 = arith.constant 0 : i32
    return %arg0, %arg1, %c0_i32 : i32, i32, i32
  }
  func.func @transform_1(%arg0: i32, %arg1: i32) -> (i32, i32) {
    %c0_i32 = arith.constant 0 : i32
    %c0_i32_0 = arith.constant 0 : i32
    %c0_i32_1 = arith.constant 0 : i32
    return %c0_i32, %c0_i32_0 : i32, i32
  }
  func.func @transform_2(%arg0: i32, %arg1: i32) -> (i32, i32) {
    %c0_i32 = arith.constant 0 : i32
    %c0_i32_0 = arith.constant 0 : i32
    %c0_i32_1 = arith.constant 0 : i32
    return %c0_i32, %c0_i32_0 : i32, i32
  }
  func.func @transform_3(%arg0: i32, %arg1: i32) -> (i32, i32, i32) {
    %c0_i32 = arith.constant 0 : i32
    %c0_i32_0 = arith.constant 0 : i32
    return %arg0, %c0_i32, %arg1 : i32, i32, i32
  }
}

</mosaic_0001>

<llo_original>
// kernel: tpu_custom_call.1
$region0: #{tpu_custom_call.1}
  #allocation0 [shape = 'u32[]', space=smem, size = 0x4, offset = 0x4, fixed_abs, tag = 'smem constant byte address 0x4 - core index']
  #allocation1 [shape = 'u32[144,128]{1,0:T(1,128)}', space=vmem, size = 0x12000, scoped, tag = 'internal scratch']
  %s0 = inlined_call_operand.vmem [shape: bf16[2,16,64], index: 0, kind: input, shape index: {}]
  %s1 = inlined_call_operand.vmem [shape: bf16[32,64], index: 1, kind: input, shape index: {}]
  %s2 = inlined_call_operand.vmem [shape: f32[32,1], index: 2, kind: input, shape index: {}]
  %s3 = inlined_call_operand.vmem [shape: f32[2,32,16], index: 3, kind: output, shape index: {}]
  %s4 = sld [smem:[#allocation0]]
  $region45: #{tpu_custom_call.1} parent=0
    _
  %s6 = ssub.s32 1, %s4
  %s7 = scalar_select 0, %s6, %s4
  loop: start=0, step=1, limit=4
  $region2: #{tpu_custom_call.1} parent=0 // loop_pre_header
    _
  $region3: #{tpu_custom_call.1} parent=0 // loop_header
    %s9 = sphi 0, %s13
    %p10 = scmp.ge.s32.totalorder %s9, 4
    %s16 = sphi 0, %s28
    %s17 = sphi 0, %s24
    %s18 = sphi 0, %s16
    %s19 = sphi 0, %s17
    %s20 = sphi 0, %s18
    %s21 = sphi 0, %s19
    %s33 = sphi 0, %s35
    %s36 = sphi 0, %s33
    %s37 = sphi 0, %s36
    %s53 = sphi 0, %s37
    %s57 = sphi 0, %s57
    %s59 = sphi 0, %s57
    %s60 = sphi 0, %s59
    %s74 = sphi 0, %s60
    %s78 = sphi 0, %s78
    %s80 = sphi 0, %s78
    %s81 = sphi 0, %s80
    %s95 = sphi 0, %s81
    %s103 = sphi 0, %s105
    %s106 = sphi 0, %s103
    %s107 = sphi 0, %s106
    %s123 = sphi 0, %s107
  $region4: #{tpu_custom_call.1} parent=0 // loop_header_branch
    %12 = sbr.rel (%p10) target = $region8
  $region5: #{tpu_custom_call.1} parent=0 // loop_body
    %s14 = ssub.s32 %s9, 1
    %s15 = ssub.s32 %s9, 2
    %s22 = sadd.s32 1, %s17
    %p23 = scmp.ge.s32.totalorder %s22, 1
    %s24 = scalar_select %p23, 0, %s22
    %s25 = sadd.s32 1, %s16
    %s26 = scalar_select %p23, %s25, %s16
    %p27 = scmp.ge.s32.totalorder %s26, 2
    %s28 = scalar_select %p27, 0, %s26
    %s29 = ssub.s32 %s16, %s28
    %s30 = ssub.s32 %s17, %s24
    %s31 = sor.u32 %s29, %s30
    %p32 = scmp.eq.s32.totalorder %s31, 0
    %s34 = sadd.s32 %s33, 1
    %s35 = scalar_select %p32, %s33, %s34
    %p38 = pneg %p32
    %p39 = scmp.eq.s32.totalorder %s9, 1
    %p40 = por %p38, %p39
    %p41 = scmp.ne.s32.totalorder %s33, %s36
    %p42 = scmp.eq.s32.totalorder %s9, 0
    %p43 = por %p41, %p42
    %p44 = scmp.ne.s32.totalorder %s33, %s36
    %p45 = scmp.eq.s32.totalorder %s14, 1
    %p46 = por %p44, %p45
    %p47 = scmp.ne.s32.totalorder %s36, %s37
    %p48 = scmp.eq.s32.totalorder %s14, 0
    %p49 = por %p47, %p48
    %p50 = scmp.ne.s32.totalorder %s36, %s37
    %p51 = scmp.eq.s32.totalorder %s15, 1
    %p52 = por %p50, %p51
    %p54 = scmp.ne.s32.totalorder %s37, %s53
    %p55 = scmp.eq.s32.totalorder %s15, 0
    %p56 = por %p54, %p55
    %s58 = sadd.s32 %s57, 1
    %p61 = scmp.eq.s32.totalorder %s9, 1
    %p62 = scmp.ne.s32.totalorder %s57, %s59
    %p63 = scmp.eq.s32.totalorder %s9, 0
    %p64 = por %p62, %p63
    %p65 = scmp.ne.s32.totalorder %s57, %s59
    %p66 = scmp.eq.s32.totalorder %s14, 1
    %p67 = por %p65, %p66
    %p68 = scmp.ne.s32.totalorder %s59, %s60
    %p69 = scmp.eq.s32.totalorder %s14, 0
    %p70 = por %p68, %p69
    %p71 = scmp.ne.s32.totalorder %s59, %s60
    %p72 = scmp.eq.s32.totalorder %s15, 1
    %p73 = por %p71, %p72
    %p75 = scmp.ne.s32.totalorder %s60, %s74
    %p76 = scmp.eq.s32.totalorder %s15, 0
    %p77 = por %p75, %p76
    %s79 = sadd.s32 %s78, 1
    %p82 = scmp.eq.s32.totalorder %s9, 1
    %p83 = scmp.ne.s32.totalorder %s78, %s80
    %p84 = scmp.eq.s32.totalorder %s9, 0
    %p85 = por %p83, %p84
    %p86 = scmp.ne.s32.totalorder %s78, %s80
    %p87 = scmp.eq.s32.totalorder %s14, 1
    %p88 = por %p86, %p87
    %p89 = scmp.ne.s32.totalorder %s80, %s81
    %p90 = scmp.eq.s32.totalorder %s14, 0
    %p91 = por %p89, %p90
    %p92 = scmp.ne.s32.totalorder %s80, %s81
    %p93 = scmp.eq.s32.totalorder %s15, 1
    %p94 = por %p92, %p93
    %p96 = scmp.ne.s32.totalorder %s81, %s95
    %p97 = scmp.eq.s32.totalorder %s15, 0
    %p98 = por %p96, %p97
    %s99 = ssub.s32 %s16, %s28
    %s100 = ssub.s32 %s17, %s24
    %s101 = sor.u32 %s99, %s100
    %p102 = scmp.eq.s32.totalorder %s101, 0
    %s104 = sadd.s32 %s103, 1
    %s105 = scalar_select %p102, %s103, %s104
    %p108 = pneg %p102
    %p109 = scmp.eq.s32.totalorder %s9, 1
    %p110 = por %p108, %p109
    %p111 = scmp.ne.s32.totalorder %s103, %s106
    %p112 = scmp.eq.s32.totalorder %s9, 0
    %p113 = por %p111, %p112
    %p114 = scmp.ne.s32.totalorder %s103, %s106
    %p115 = scmp.eq.s32.totalorder %s14, 1
    %p116 = por %p114, %p115
    %p117 = scmp.ne.s32.totalorder %s106, %s107
    %p118 = scmp.eq.s32.totalorder %s14, 0
    %p119 = por %p117, %p118
    %p120 = scmp.ne.s32.totalorder %s106, %s107
    %p121 = scmp.eq.s32.totalorder %s15, 1
    %p122 = por %p120, %p121
    %p124 = scmp.ne.s32.totalorder %s107, %s123
    %p125 = scmp.eq.s32.totalorder %s15, 0
    %p126 = por %p124, %p125
    %p127 = scmp.le.s32.totalorder 1, %s9
    %p128 = scmp.lt.s32.totalorder %s9, 3
    %p129 = pnand %p127, %p128
    %p130 = pneg %p129
    // Predicated region
    $region9: #{tpu_custom_call.1} parent=5 // pred_check
      _
    $region10: #{tpu_custom_call.1} parent=5 // pred_check_branch
      %132 = sbr.rel (%p129) target = $region12
    $region11: #{tpu_custom_call.1} parent=5 // pred_region
      %s133 = ssub.s32 %s9, 1
      // Predicated region
      $region13: #{tpu_custom_call.1} parent=11 // pred_check
        %p134 = pneg %p70
      $region14: #{tpu_custom_call.1} parent=11 // pred_check_branch
        %136 = sbr.rel (%p134) target = $region16
      $region15: #{tpu_custom_call.1} parent=11 // pred_region
        _
      $region16: #{tpu_custom_call.1} parent=11 // pred_fallthru
        _
      // Predicated region
      $region17: #{tpu_custom_call.1} parent=11 // pred_check
        %p137 = pneg %p91
      $region18: #{tpu_custom_call.1} parent=11 // pred_check_branch
        %139 = sbr.rel (%p137) target = $region20
      $region19: #{tpu_custom_call.1} parent=11 // pred_region
        _
      $region20: #{tpu_custom_call.1} parent=11 // pred_fallthru
        _
    $region12: #{tpu_custom_call.1} parent=5 // pred_fallthru
      _
    %p140 = scmp.lt.s32.totalorder %s9, 2
    // Predicated region
    $region21: #{tpu_custom_call.1} parent=5 // pred_check
      %p141 = pneg %p140
    $region22: #{tpu_custom_call.1} parent=5 // pred_check_branch
      %143 = sbr.rel (%p141) target = $region24
    $region23: #{tpu_custom_call.1} parent=5 // pred_region
      // Predicated region
      $region25: #{tpu_custom_call.1} parent=23 // pred_check
        %p144 = pneg %p43
      $region26: #{tpu_custom_call.1} parent=23 // pred_check_branch
        %146 = sbr.rel (%p144) target = $region28
      $region27: #{tpu_custom_call.1} parent=23 // pred_region
        %s147 = smul.u32 2, %s17
        %p148 = scmp.lt.s32.totalorder %s16, 1
        %s149 = scalar_select %p148, %s16, 1
        %p150 = scmp.lt.s32.totalorder %s147, 1
        %s151 = scalar_select %p150, %s147, 1
        %s152 = smul.addr %s149, 2
        %s153 = sadd.s32 %s151, %s152
        %s154 = smul.addr %s153, 4
        %s155 = scalar_lea.vmem %s0, %s154
        %s156 = smul.u32 2, %s17
      $region28: #{tpu_custom_call.1} parent=23 // pred_fallthru
        _
    $region24: #{tpu_custom_call.1} parent=5 // pred_fallthru
      _
    %p157 = scmp.le.s32.totalorder 1, %s9
    %p158 = scmp.lt.s32.totalorder %s9, 3
    %p159 = pnand %p157, %p158
    %p160 = pneg %p159
    // Predicated region
    $region29: #{tpu_custom_call.1} parent=5 // pred_check
      _
    $region30: #{tpu_custom_call.1} parent=5 // pred_check_branch
      %162 = sbr.rel (%p159) target = $region32
    $region31: #{tpu_custom_call.1} parent=5 // pred_region
      %s163 = ssub.s32 %s9, 1
      %s164 = smul.u32 2, %s19
      %p165 = scmp.lt.s32.totalorder %s18, 1
      %s166 = scalar_select %p165, %s18, 1
      %p167 = scmp.lt.s32.totalorder %s164, 1
      %s168 = scalar_select %p167, %s164, 1
      %s169 = smul.addr %s166, 2
      %s170 = sadd.s32 %s168, %s169
      %s171 = smul.addr %s170, 4
      %s172 = scalar_lea.vmem %s0, %s171
      %p173 = pneg %p49
      %p174 = pneg %p46
      %p175 = pneg %p70
      %p176 = pneg %p67
      %p177 = pneg %p91
      %p178 = pneg %p88
      %p179 = pneg %p119
      %p180 = pneg %p116
      %p181 = scmp.lt.s32.totalorder %s18, 1
      %s182 = scalar_select %p181, %s18, 1
      %p183 = scmp.lt.s32.totalorder %s19, 0
      %s184 = scalar_select %p183, %s19, 0
      %s185 = smul.addr %s182, 4
      %s186 = sadd.s32 %s184, %s185
      %s187 = smul.addr %s186, 8
      %s188 = scalar_lea.vmem %s3, %s187
      %s189 = smul.u32 2, %s19
      %p190 = scmp.lt.s32.totalorder %s18, 1
      %s191 = scalar_select %p190, %s18, 1
      %p192 = scmp.lt.s32.totalorder %s189, 1
      %s193 = scalar_select %p192, %s189, 1
      %s194 = smul.addr %s191, 2
      %s195 = sadd.s32 %s193, %s194
      %s196 = smul.addr %s195, 4
      %s197 = scalar_lea.vmem %s0, %s196
      %s198 = smul.u32 2, %s19
      %p199 = scmp.lt.s32.totalorder %s18, 1
      %s200 = scalar_select %p199, %s18, 1
      %p201 = scmp.lt.s32.totalorder %s19, 0
      %s202 = scalar_select %p201, %s19, 0
      %s203 = smul.addr %s200, 4
      %s204 = sadd.s32 %s202, %s203
      %s205 = smul.addr %s204, 8
      %s206 = scalar_lea.vmem %s3, %s205
      %v208 = vld [vmem:[%s197] sm:$0xf]
      %v209 = vld [vmem:[%s197 + $0x4] sm:$0xf]
      %v210 = vld [vmem:[%s1] sm:$0xf]
      %v211 = vld [vmem:[%s1 + $0x4] sm:$0xf]
      %v212 = vld [vmem:[%s1 + $0x8] sm:$0xf]
      %v213 = vld [vmem:[%s1 + $0xc] sm:$0xf]
      %v214 = vld [vmem:[%s2] sm:$0xff]
      %v215 = vld [vmem:[%s2 + $0x8] sm:$0xff]
      %v216 = vld [vmem:[%s2 + $0x10] sm:$0xff]
      %v217 = vld [vmem:[%s2 + $0x18] sm:$0xff]
      %219 = vset.pattern.permute.xlu0 0
      %220 = vperm.xlu0 %219, %v214
      %v221 = vpop.permute.xlu0 %220
      %224 = vset.pattern.permute.xlu0 0
      %225 = vperm.xlu0 %224, %v215
      %v226 = vpop.permute.xlu0 %225
      %229 = vset.pattern.permute.xlu0 0
      %230 = vperm.xlu0 %229, %v216
      %v231 = vpop.permute.xlu0 %230
      %234 = vset.pattern.permute.xlu0 0
      %235 = vperm.xlu0 %234, %v217
      %v236 = vpop.permute.xlu0 %235
      %v242 = vunpack.c.l.b16 %v210
      %v243 = vunpack.c.l.b16 %v211
      %v244 = vunpack.c.l.b16 %v212
      %v245 = vunpack.c.l.b16 %v213
      %v246 = vpack.c.b16 %v243, %v242
      %v247 = vpack.c.b16 %v245, %v244
      %v250 = vunpack.c.l.b16 %v208
      %v251 = vunpack.c.l.b16 %v209
      %v252 = vpack.c.b16 %v251, %v250
      %vm253 = vcmask 523264
      %v255 = vsel %vm253, %v246, 0
      %v258 = vsel %vm253, %v247, 0
      %v261 = vsel %vm253, %v252, 0
      %263 = vmatprep.subr.bf16.mxu0 0
      %264 = vmatpush1.bf16.xpose.msra.mxu0 %v261
      %265 = vmatprep.subr.bf16.mxu0 0
      %266 = vmatpush1.bf16.xpose.msra.mxu0 0
      %267 = vmatprep.subr.bf16.mxu0 0
      %268 = vmatpush1.bf16.xpose.msra.mxu0 0
      %269 = vmatprep.subr.bf16.mxu0 0
      %270 = vmatpush1.bf16.xpose.msra.mxu0 0
      %271 = vmatprep.subr.bf16.mxu0 0
      %272 = vmatpush1.bf16.xpose.msra.mxu0 0
      %273 = vmatprep.subr.bf16.mxu0 0
      %274 = vmatpush1.bf16.xpose.msra.mxu0 0
      %275 = vmatprep.subr.bf16.mxu0 0
      %276 = vmatpush1.bf16.xpose.msra.mxu0 0
      %277 = vmatprep.subr.bf16.mxu0 0
      %278 = vmatpush1.bf16.xpose.msra.mxu0 0
      %279 = vmatprep.subr.bf16.mxu0 0
      %280 = vmatpush1.bf16.xpose.msra.mxu0 0
      %281 = vmatprep.subr.bf16.mxu0 0
      %282 = vmatpush1.bf16.xpose.msra.mxu0 0
      %283 = vmatprep.subr.bf16.mxu0 0
      %284 = vmatpush1.bf16.xpose.msra.mxu0 0
      %285 = vmatprep.subr.bf16.mxu0 0
      %286 = vmatpush1.bf16.xpose.msra.mxu0 0
      %287 = vmatprep.subr.bf16.mxu0 0
      %288 = vmatpush1.bf16.xpose.msra.mxu0 0
      %289 = vmatprep.subr.bf16.mxu0 0
      %290 = vmatpush1.bf16.xpose.msra.mxu0 0
      %291 = vmatprep.subr.bf16.mxu0 0
      %292 = vmatpush1.bf16.xpose.msra.mxu0 0
      %293 = vmatprep.subr.bf16.mxu0 0
      %294 = vmatpush1.bf16.xpose.msra.mxu0 0
      %295 = vmatprep.mubr.bf16.mxu0 0
      %296 = vmatmul.mubr.bf16.gmra.mrb[0].mxu0 %v255
      %v297 = vpop.f32.mrb[0].mxu0
      %v298 = vadd.f32 %v221, %v297
      %v299 = vpop.f32.mrb[0].mxu0
      %v300 = vpop.f32.mrb[0].mxu0
      %v301 = vadd.f32 %v226, %v300
      %v302 = vpop.f32.mrb[0].mxu0
      %303 = vmatprep.mubr.bf16.mxu0 0
      %304 = vmatmul.mubr.bf16.gmra.mrb[0].mxu0 %v258
      %v305 = vpop.f32.mrb[0].mxu0
      %v306 = vadd.f32 %v231, %v305
      %v307 = vpop.f32.mrb[0].mxu0
      %v308 = vpop.f32.mrb[0].mxu0
      %v309 = vadd.f32 %v236, %v308
      %v310 = vpop.f32.mrb[0].mxu0
      %311 = vdwg.mxu0
      %v312 = vmul.f32 %v298, %v298
      %v313 = vmul.f32 %v301, %v301
      %v314 = vmul.f32 %v306, %v306
      %v315 = vmul.f32 %v309, %v309
      %v316 = vmul.f32 %v298, %v312
      %v317 = vmul.f32 %v301, %v313
      %v318 = vmul.f32 %v306, %v314
      %v319 = vmul.f32 %v309, %v315
      %v320 = vmul.f32 %v316, 0.044715
      %v321 = vmul.f32 %v317, 0.044715
      %v322 = vmul.f32 %v318, 0.044715
      %v323 = vmul.f32 %v319, 0.044715
      %v324 = vadd.f32 %v298, %v320
      %v325 = vadd.f32 %v301, %v321
      %v326 = vadd.f32 %v306, %v322
      %v327 = vadd.f32 %v309, %v323
      %v328 = vmul.f32 %v324, 0.7978846
      %v329 = vmul.f32 %v325, 0.7978846
      %v330 = vmul.f32 %v326, 0.7978846
      %v331 = vmul.f32 %v327, 0.7978846
      %v332 = vtanh.pop %v328
      %v333 = vtanh.pop %v329
      %v334 = vtanh.pop %v330
      %v335 = vtanh.pop %v331
      %v336 = vadd.f32 %v332, 1.0
      %v337 = vadd.f32 %v333, 1.0
      %v338 = vadd.f32 %v334, 1.0
      %v339 = vadd.f32 %v335, 1.0
      %v340 = vmul.f32 %v336, 0.5
      %v341 = vmul.f32 %v337, 0.5
      %v342 = vmul.f32 %v338, 0.5
      %v343 = vmul.f32 %v339, 0.5
      %v344 = vmul.f32 %v298, %v340
      %v345 = vmul.f32 %v301, %v341
      %v346 = vmul.f32 %v306, %v342
      %v347 = vmul.f32 %v309, %v343
      %vm348 = vcmask 130048
      %349 = vst.msk [vmem:[%s206] sm:$0xff] %vm348, %v344
      %350 = vst.msk [vmem:[%s206 + $0x8] sm:$0xff] %vm348, %v345
      %351 = vst.msk [vmem:[%s206 + $0x10] sm:$0xff] %vm348, %v346
      %352 = vst.msk [vmem:[%s206 + $0x18] sm:$0xff] %vm348, %v347
      %p353 = scmp.lt.s32.totalorder %s18, 1
      %s354 = scalar_select %p353, %s18, 1
      %p355 = scmp.lt.s32.totalorder %s19, 0
      %s356 = scalar_select %p355, %s19, 0
      %s357 = smul.addr %s354, 4
      %s358 = sadd.s32 %s356, %s357
      %s359 = smul.addr %s358, 8
      %s360 = scalar_lea.vmem %s3, %s359
      // Predicated region
      $region33: #{tpu_custom_call.1} parent=31 // pred_check
        %p361 = pneg %p116
      $region34: #{tpu_custom_call.1} parent=31 // pred_check_branch
        %363 = sbr.rel (%p361) target = $region36
      $region35: #{tpu_custom_call.1} parent=31 // pred_region
        _
      $region36: #{tpu_custom_call.1} parent=31 // pred_fallthru
        _
    $region32: #{tpu_custom_call.1} parent=5 // pred_fallthru
      _
    %p364 = scmp.le.s32.totalorder 2, %s9
    // Predicated region
    $region37: #{tpu_custom_call.1} parent=5 // pred_check
      %p365 = pneg %p364
    $region38: #{tpu_custom_call.1} parent=5 // pred_check_branch
      %367 = sbr.rel (%p365) target = $region40
    $region39: #{tpu_custom_call.1} parent=5 // pred_region
      %s368 = ssub.s32 %s9, 2
      // Predicated region
      $region41: #{tpu_custom_call.1} parent=39 // pred_check
        %p369 = pneg %p122
      $region42: #{tpu_custom_call.1} parent=39 // pred_check_branch
        %371 = sbr.rel (%p369) target = $region44
      $region43: #{tpu_custom_call.1} parent=39 // pred_region
        %p372 = scmp.lt.s32.totalorder %s20, 1
        %s373 = scalar_select %p372, %s20, 1
        %p374 = scmp.lt.s32.totalorder %s21, 0
        %s375 = scalar_select %p374, %s21, 0
        %s376 = smul.addr %s373, 4
        %s377 = sadd.s32 %s375, %s376
        %s378 = smul.addr %s377, 8
        %s379 = scalar_lea.vmem %s3, %s378
      $region44: #{tpu_custom_call.1} parent=39 // pred_fallthru
        _
    $region40: #{tpu_custom_call.1} parent=5 // pred_fallthru
      _
  $region6: #{tpu_custom_call.1} parent=0 // loop_footer
    %s13 = sadd.s32 1, %s9
  $region7: #{tpu_custom_call.1} parent=0 // loop_footer_branch
    %8 = sbr.rel target = $region3
  $region8: #{tpu_custom_call.1} parent=0 // loop_exit
    _

</llo_original>
